<compile_context>
chip_gen: v5e
topology: v5e:2x2
jax: 0.10.0
libtpu: 0.0.40
codegen_flags: <defaults>
</compile_context>

<pallas_src>
import jax
import jax.numpy as jnp
from jax.experimental import pallas as pl
from jax.experimental.pallas import tpu as pltpu

_LANE = 128
_EPS = 1e-12


def clip_sim_kernel(x_ref, w_img_ref, b_ref, text_ref, out_ref):
    """One batch tile.

    x_ref     : (TB, CHW) f32   flat NCHW pixels
    w_img_ref : (CHW, Ep) bf16  pooling+patchify+proj fused weight, padded
    b_ref     : (1, Ep)   f32   fused bias
    text_ref  : (Ep, Lp)  bf16  100 * l2norm(prompts), transposed, padded
    out_ref   : (TB, Lp)  f32   similarities (valid cols = first L)
    """
    # --- miniature image encoder: single fused GEMM (pooling on the MXU) ---
    x_bf = x_ref[...].astype(jnp.bfloat16)
    img = jnp.dot(x_bf, w_img_ref[...],
                  preferred_element_type=jnp.float32) + b_ref[...]

    # --- ClipSimModel.forward: L2-normalize image features (EUP rsqrt) ---
    inv = jax.lax.rsqrt(jnp.sum(img * img, axis=-1, keepdims=True) + _EPS)
    img_n = (img * inv).astype(jnp.bfloat16)

    # --- 100 * img_n @ txt_n.T  (scale + transpose pre-folded into text_ref) ---
    out_ref[...] = jnp.dot(img_n, text_ref[...],
                           preferred_element_type=jnp.float32)


def _round_up(n, m):
    return ((n + m - 1) // m) * m


def _cdiv(a, b):
    return -(-a // b)


def _pad2d(a, rows, cols):
    return jnp.pad(a, ((0, rows - a.shape[0]), (0, cols - a.shape[1])))


def clip_sim_forward(x, params):
    """x: (B, C, H, W) float32, NCHW like PyTorch."""
    B, C, H, W = x.shape
    P = params['patch_size']
    assert H % P == 0 and W % P == 0
    Np = (H // P) * (W // P)
    CHW = C * H * W
    E = params['w_proj'].shape[1]
    L = params['prompts'].shape[0]

    Ep = _round_up(E, _LANE)
    Lp = _round_up(L, _LANE)

    # --- trace-time algebraic fusion (constants, computed once per trace) ---
    w_fused = params['w_patch'] @ params['w_proj']            # (C*P*P, E) f32
    b_fused = params['b_patch'] @ params['w_proj']            # (1, E)     f32
    # Fold mean-pool (1/Np) and the NCHW patchify permutation into the weight:
    # W_img[(c,h,w), e] = w_fused[(c, h%P, w%P), e] / Np
    w_r = (w_fused / Np).reshape(C, P, P, E)
    W_img = jnp.broadcast_to(
        w_r[:, None, :, None, :, :],
        (C, H // P, P, W // P, P, E)).reshape(CHW, E)          # (CHW, E) f32

    txt = params['prompts']
    txt_scaled = 100.0 * txt * jax.lax.rsqrt(
        jnp.sum(txt * txt, axis=-1, keepdims=True) + _EPS)    # (L, E) f32

    # lane-dense, zero-padded bf16 MXU operands (accumulation stays f32)
    W_img_p = _pad2d(W_img, CHW, Ep).astype(jnp.bfloat16)
    b_p = _pad2d(b_fused, 1, Ep)                              # f32 epilogue bias
    txt_t_p = _pad2d(txt_scaled.T, Ep, Lp).astype(jnp.bfloat16)

    # Activations: plain reshape (no transpose / pad / cast copy in the wrapper)
    x_flat = x.reshape(B, CHW)

    # --- VMEM-budget-derived batch tile + megacore-friendly grid ---
    budget = 32 * 1024 * 1024                       # conservative across gens
    weight_bytes = (W_img_p.size * 2 + b_p.size * 4 + txt_t_p.size * 2)
    per_row = 2 * CHW * 4 + 2 * Lp * 4              # double-buffered x + out
    tb_fit = max(8, int((budget - weight_bytes) // per_row) // 8 * 8)
    if B <= 8:
        TB = B                                      # single tile, tiny batch
    else:
        # >=2 (up to 8) grid steps so v7x's 2nd TC runs and DMA pipelines
        target_splits = min(8, max(2, B // 8))
        n_splits = max(target_splits, _cdiv(B, tb_fit))
        TB = min(tb_fit, _round_up(_cdiv(B, n_splits), 8))
    grid = (pl.cdiv(B, TB),)

    cost = pl.CostEstimate(
        flops=int(2 * B * (CHW * Ep + Ep * Lp)),
        transcendentals=int(B),
        bytes_accessed=int(B * CHW * 4 + W_img_p.size * 2 + b_p.size * 4
                           + txt_t_p.size * 2 + B * Lp * 4),
    )

    sims = pl.pallas_call(
        clip_sim_kernel,
        out_shape=jax.ShapeDtypeStruct((B, Lp), jnp.float32),
        grid=grid,
        in_specs=[
            pl.BlockSpec((TB, CHW), lambda i: (i, 0)),
            pl.BlockSpec((CHW, Ep), lambda i: (0, 0)),
            pl.BlockSpec((1, Ep), lambda i: (0, 0)),
            pl.BlockSpec((Ep, Lp), lambda i: (0, 0)),
        ],
        out_specs=pl.BlockSpec((TB, Lp), lambda i: (i, 0)),
        compiler_params=pltpu.CompilerParams(
            dimension_semantics=("parallel",),
            vmem_limit_bytes=48 * 1024 * 1024),
        cost_estimate=cost,
    )(x_flat, W_img_p, b_p, txt_t_p)

    # drop padded prompt lanes, then similarity.squeeze()
    return jnp.squeeze(sims[:, :L])


def make_params(key, *, C=3, patch_size=4, D=32, E=32, num_classes=2):
    """Deterministic synthetic parameters (shapes implied by the module)."""
    Cpp = C * patch_size * patch_size
    k1, k2, k3, k4 = jax.random.split(key, 4)
    return {
        'patch_size': patch_size,
        'w_patch': (jax.random.normal(k1, (Cpp, D), jnp.float32)
                    * (1.0 / jnp.sqrt(Cpp))),
        'b_patch': jax.random.normal(k2, (1, D), jnp.float32) * 0.01,
        'w_proj': (jax.random.normal(k3, (D, E), jnp.float32)
                   * (1.0 / jnp.sqrt(D))),
        # self.prompts = Parameter(encode_text(prompts)) -> (num_classes, E)
        'prompts': jax.random.normal(k4, (num_classes, E), jnp.float32),
    }


def _reference(x, params):
    """Pure-JAX reference using the kernel's exact fusion + precision policy
    (bf16 MXU operands, f32 accumulation and epilogue)."""
    B, C, H, W = x.shape
    P = params['patch_size']
    Np = (H // P) * (W // P)
    Cpp = C * P * P

    def q(a):  # bf16 quantization applied to MXU operands
        return a.astype(jnp.bfloat16).astype(jnp.float32)

    patches = x.reshape(B, C, H // P, P, W // P, P)
    patches = patches.transpose(0, 2, 4, 1, 3, 5).reshape(B, Np, Cpp)

    w_fused = params['w_patch'] @ params['w_proj']            # (Cpp, E)
    b_fused = params['b_patch'] @ params['w_proj']            # (1, E)
    w_img = q(w_fused / Np)                                   # matches kernel cast
    img = jnp.einsum('bnk,ke->be', q(patches), w_img) + b_fused
    img_n = img * jax.lax.rsqrt(jnp.sum(img * img, -1, keepdims=True) + _EPS)
    txt = params['prompts']
    txt_scaled = 100.0 * txt * jax.lax.rsqrt(
        jnp.sum(txt * txt, -1, keepdims=True) + _EPS)
    sims = q(img_n) @ q(txt_scaled).T
    return jnp.squeeze(sims)


if __name__ == "__main__":
    key = jax.random.PRNGKey(0)
    kx, kp = jax.random.split(key)

    B, C, H, W = 2, 3, 16, 16          # small shapes; RGB like CLIP
    x = jax.random.normal(kx, (B, C, H, W), jnp.float32)
    params = make_params(kp, C=C, patch_size=4, D=32, E=32, num_classes=2)

    out = jax.block_until_ready(clip_sim_forward(x, params))
    ref = jax.block_until_ready(_reference(x, params))

    assert out.shape == ref.shape == (B, 2)
    assert jnp.allclose(out, ref, atol=1e-2, rtol=1e-2), (out, ref)

    print("KERNEL_OK")
</pallas_src>

<mosaic_0001>
module attributes {stable_mosaic.version = 11 : i64} {
  func.func @clip_sim_kernel(%arg0: i32, %arg1: memref<2x768xf32, #tpu.memory_space<vmem>>, %arg2: memref<768x128xbf16, #tpu.memory_space<vmem>>, %arg3: memref<1x128xf32, #tpu.memory_space<vmem>>, %arg4: memref<128x128xbf16, #tpu.memory_space<vmem>>, %arg5: memref<2x128xf32, #tpu.memory_space<vmem>>) attributes {dimension_semantics = [#tpu.dimension_semantics<parallel>], iteration_bounds = array<i64: 1>, scalar_prefetch = 0 : i64, scratch_operands = 0 : i64, tpu.core_type = #tpu.core_type<tc>, window_params = [{transform_indices = @transform_0, window_bounds = array<i64: 2, 768>}, {pipeline_mode = #tpu.pipeline_mode<synchronous>, transform_indices = @transform_1, window_bounds = array<i64: 768, 128>}, {pipeline_mode = #tpu.pipeline_mode<synchronous>, transform_indices = @transform_2, window_bounds = array<i64: 1, 128>}, {pipeline_mode = #tpu.pipeline_mode<synchronous>, transform_indices = @transform_3, window_bounds = array<i64: 128, 128>}, {transform_indices = @transform_4, window_bounds = array<i64: 2, 128>}]} {
    %c0 = arith.constant 0 : index
    %c0_0 = arith.constant 0 : index
    %0 = vector.load %arg1[%c0, %c0_0] : memref<2x768xf32, #tpu.memory_space<vmem>>, vector<2x768xf32>
    %1 = arith.truncf %0 : vector<2x768xf32> to vector<2x768xbf16>
    %c0_1 = arith.constant 0 : index
    %c0_2 = arith.constant 0 : index
    %2 = vector.load %arg2[%c0_1, %c0_2] : memref<768x128xbf16, #tpu.memory_space<vmem>>, vector<768x128xbf16>
    %cst = arith.constant dense<0.000000e+00> : vector<2x128xf32>
    %3 = tpu.matmul %1, %2, %cst {dimension_numbers = #tpu.dot_dimension_numbers<[1], [0], [0], [1], [0, 0, 1, 1], [], []>} : vector<2x768xbf16>, vector<768x128xbf16>, vector<2x128xf32> -> vector<2x128xf32>
    %c0_3 = arith.constant 0 : index
    %c0_4 = arith.constant 0 : index
    %4 = vector.load %arg3[%c0_3, %c0_4] : memref<1x128xf32, #tpu.memory_space<vmem>>, vector<1x128xf32>
    %5 = vector.broadcast %4 : vector<1x128xf32> to vector<2x128xf32>
    %6 = arith.addf %3, %5 : vector<2x128xf32>
    %7 = arith.mulf %6, %6 : vector<2x128xf32>
    %cst_5 = arith.constant dense<0.000000e+00> : vector<2xf32>
    %8 = vector.multi_reduction <add>, %7, %cst_5 [1] : vector<2x128xf32> to vector<2xf32>
    %9 = vector.shape_cast %8 : vector<2xf32> to vector<2x1xf32>
    %cst_6 = arith.constant 9.99999996E-13 : f32
    %10 = vector.broadcast %cst_6 : f32 to vector<2x1xf32>
    %11 = arith.addf %9, %10 : vector<2x1xf32>
    %12 = math.rsqrt %11 : vector<2x1xf32>
    %13 = vector.broadcast %12 : vector<2x1xf32> to vector<2x128xf32>
    %14 = arith.mulf %6, %13 : vector<2x128xf32>
    %15 = arith.truncf %14 : vector<2x128xf32> to vector<2x128xbf16>
    %c0_7 = arith.constant 0 : index
    %c0_8 = arith.constant 0 : index
    %16 = vector.load %arg4[%c0_7, %c0_8] : memref<128x128xbf16, #tpu.memory_space<vmem>>, vector<128x128xbf16>
    %cst_9 = arith.constant dense<0.000000e+00> : vector<2x128xf32>
    %17 = tpu.matmul %15, %16, %cst_9 {dimension_numbers = #tpu.dot_dimension_numbers<[1], [0], [0], [1], [0, 0, 1, 1], [], []>} : vector<2x128xbf16>, vector<128x128xbf16>, vector<2x128xf32> -> vector<2x128xf32>
    %c0_10 = arith.constant 0 : index
    %c0_11 = arith.constant 0 : index
    %18 = vector.load %arg5[%c0_10, %c0_11] : memref<2x128xf32, #tpu.memory_space<vmem>>, vector<2x128xf32>
    tpu.vector_store %arg5[%c0_10, %c0_11], %17 {strides = array<i32>} : memref<2x128xf32, #tpu.memory_space<vmem>>, vector<2x128xf32>,
    return
  }
  func.func @transform_0(%arg0: i32) -> (i32, i32) {
    %c0_i32 = arith.constant 0 : i32
    %c0_i32_0 = arith.constant 0 : i32
    return %arg0, %c0_i32 : i32, i32
  }
  func.func @transform_1(%arg0: i32) -> (i32, i32) {
    %c0_i32 = arith.constant 0 : i32
    %c0_i32_0 = arith.constant 0 : i32
    %c0_i32_1 = arith.constant 0 : i32
    return %c0_i32, %c0_i32_0 : i32, i32
  }
  func.func @transform_2(%arg0: i32) -> (i32, i32) {
    %c0_i32 = arith.constant 0 : i32
    %c0_i32_0 = arith.constant 0 : i32
    %c0_i32_1 = arith.constant 0 : i32
    return %c0_i32, %c0_i32_0 : i32, i32
  }
  func.func @transform_3(%arg0: i32) -> (i32, i32) {
    %c0_i32 = arith.constant 0 : i32
    %c0_i32_0 = arith.constant 0 : i32
    %c0_i32_1 = arith.constant 0 : i32
    return %c0_i32, %c0_i32_0 : i32, i32
  }
  func.func @transform_4(%arg0: i32) -> (i32, i32) {
    %c0_i32 = arith.constant 0 : i32
    %c0_i32_0 = arith.constant 0 : i32
    return %arg0, %c0_i32 : i32, i32
  }
}

</mosaic_0001>

<llo_original>
// kernel: tpu_custom_call.1
$region0: #{tpu_custom_call.1}
  #allocation0 [shape = 'u32[]', space=smem, size = 0x4, offset = 0x4, fixed_abs, tag = 'smem constant byte address 0x4 - core index']
  #allocation1 [shape = 'u32[72,128]{1,0:T(1,128)}', space=vmem, size = 0x9000, scoped, tag = 'internal scratch']
  %s0 = inlined_call_operand.hbm [shape: f32[2,768], index: 0, kind: input, shape index: {}]
  %s1 = inlined_call_operand.hbm [shape: bf16[768,128], index: 1, kind: input, shape index: {}]
  %s2 = inlined_call_operand.vmem [shape: f32[1,128], index: 2, kind: input, shape index: {}]
  %s3 = inlined_call_operand.hbm [shape: bf16[128,128], index: 3, kind: input, shape index: {}]
  %s4 = inlined_call_operand.hbm [shape: f32[2,128], index: 4, kind: output, shape index: {}]
  %s5 = sld [smem:[#allocation0]]
  $region38: #{tpu_custom_call.1} parent=0
    _
  %s7 = ssub.s32 1, %s5
  %s8 = scalar_select 0, %s7, %s5
  $region1: #{tpu_custom_call.1} parent=0
    #allocation2 [shape = 'u8[6144]{0}', space=vmem, size = 0x1800, scoped, tag = 'input window, operand 0, single buffered']
    #allocation3 [shape = 's32[1]{0}', space=sflag, size = 0x4, scoped, tag = 'scoped memory for tpu_custom_call.1']
    #allocation4 [shape = 's32[1]{0}', space=sflag, size = 0x4, scoped, tag = 'scoped memory for tpu_custom_call.1']
    #allocation5 [shape = 'u8[196608]{0}', space=vmem, size = 0x30000, scoped, tag = 'input window, operand 1, single buffered']
    #allocation6 [shape = 's32[1]{0}', space=sflag, size = 0x4, scoped, tag = 'scoped memory for tpu_custom_call.1']
    #allocation7 [shape = 'u8[32768]{0}', space=vmem, size = 0x8000, scoped, tag = 'input window, operand 3, single buffered']
    #allocation8 [shape = 'u8[1024]{0}', space=vmem, size = 0x400, scoped, tag = 'output window, operand 0, single buffered']
    %9 = vsyncpa [#allocation3], 0
    %10 = vsyncpa [#allocation6], 0
    %11 = vsyncpa [#allocation4], 0
    // Predicated region
    $region2: #{tpu_custom_call.1} parent=1 // pred_check
      _
    $region3: #{tpu_custom_call.1} parent=1 // pred_check_branch
      %13 = sbr.rel (0) target = $region5
    $region4: #{tpu_custom_call.1} parent=1 // pred_region
      %15 = vsyncadd [#allocation3], 0
      %s17 = sshll.u32 %s0, 4
      %s18 = int_to_ptr.hbm [resolvable:$true] %s17
      %s19 = sshll.u32 [#allocation2], 4
      %s20 = int_to_ptr.vmem [resolvable:$true] %s19
      %22 = dma.hbm_to_vmem [thread:$0]  %s18, 192, %s20, [#allocation3]
    $region5: #{tpu_custom_call.1} parent=1 // pred_fallthru
      _
    // Predicated region
    $region6: #{tpu_custom_call.1} parent=1 // pred_check
      _
    $region7: #{tpu_custom_call.1} parent=1 // pred_check_branch
      %24 = sbr.rel (0) target = $region9
    $region8: #{tpu_custom_call.1} parent=1 // pred_region
      %26 = vsyncadd [#allocation6], 0
      %s27 = sshll.u32 %s1, 4
      %s28 = int_to_ptr.hbm [resolvable:$true] %s27
      %s29 = sshll.u32 [#allocation5], 4
      %s30 = int_to_ptr.vmem [resolvable:$true] %s29
      %35 = dma.hbm_to_vmem [thread:$0]  %s28, 6144, %s30, [#allocation6], 64, 64, 4
    $region9: #{tpu_custom_call.1} parent=1 // pred_fallthru
      _
    // Predicated region
    $region10: #{tpu_custom_call.1} parent=1 // pred_check
      _
    $region11: #{tpu_custom_call.1} parent=1 // pred_check_branch
      %37 = sbr.rel (0) target = $region13
    $region12: #{tpu_custom_call.1} parent=1 // pred_region
      _
    $region13: #{tpu_custom_call.1} parent=1 // pred_fallthru
      _
    // Predicated region
    $region14: #{tpu_custom_call.1} parent=1 // pred_check
      _
    $region15: #{tpu_custom_call.1} parent=1 // pred_check_branch
      %39 = sbr.rel (0) target = $region17
    $region16: #{tpu_custom_call.1} parent=1 // pred_region
      %41 = vsyncadd [#allocation6], 0
      %s42 = sshll.u32 %s3, 4
      %s43 = int_to_ptr.hbm [resolvable:$true] %s42
      %s44 = sshll.u32 [#allocation7], 4
      %s45 = int_to_ptr.vmem [resolvable:$true] %s44
      %50 = dma.hbm_to_vmem [thread:$0]  %s43, 1024, %s45, [#allocation6], 64, 64, 4
    $region17: #{tpu_custom_call.1} parent=1 // pred_fallthru
      _
    // Predicated region
    $region18: #{tpu_custom_call.1} parent=1 // pred_check
      _
    $region19: #{tpu_custom_call.1} parent=1 // pred_check_branch
      %52 = sbr.rel (0) target = $region21
    $region20: #{tpu_custom_call.1} parent=1 // pred_region
      %54 = dma.done [#allocation3], 192
    $region21: #{tpu_custom_call.1} parent=1 // pred_fallthru
      _
    // Predicated region
    $region22: #{tpu_custom_call.1} parent=1 // pred_check
      _
    $region23: #{tpu_custom_call.1} parent=1 // pred_check_branch
      %56 = sbr.rel (0) target = $region25
    $region24: #{tpu_custom_call.1} parent=1 // pred_region
      %58 = dma.done [#allocation6], 6144
    $region25: #{tpu_custom_call.1} parent=1 // pred_fallthru
      _
    // Predicated region
    $region26: #{tpu_custom_call.1} parent=1 // pred_check
      _
    $region27: #{tpu_custom_call.1} parent=1 // pred_check_branch
      %60 = sbr.rel (0) target = $region29
    $region28: #{tpu_custom_call.1} parent=1 // pred_region
      %62 = dma.done [#allocation6], 1024
    $region29: #{tpu_custom_call.1} parent=1 // pred_fallthru
      _
    %v63 = vld [vmem:[#allocation2] sm:$0xff]
    %v64 = vld [vmem:[#allocation2 + $0x8] sm:$0xf]
    %67 = vst [vmem:[#allocation1] ss:$4 sm:$0xff] %v63
    %s68 = scalar_lea.vmem [#allocation1], 32
    %69 = vst [vmem:[%s68] ss:$4 sm:$0xff] %v64
    %v70 = vld.sshfl [vmem:[#allocation1] sm:$0xff pattern:$0x73625140]
    %v71 = vld.sshfl [vmem:[#allocation1 + $0x8] sm:$0xff pattern:$0x73625140]
    %v72 = vld.sshfl [vmem:[#allocation1 + $0x10] sm:$0xff pattern:$0x73625140]
    %v73 = vld.sshfl [vmem:[#allocation1 + $0x18] sm:$0xff pattern:$0x73625140]
    %v74 = vld.sshfl [vmem:[#allocation1 + $0x20] sm:$0xff pattern:$0x73625140]
    %v75 = vld.sshfl [vmem:[#allocation1 + $0x28] sm:$0xff pattern:$0x73625140]
    %v82 = vpack.c.bf16 %v70, %v70
    %v83 = vpack.c.bf16 %v71, %v71
    %v84 = vpack.c.bf16 %v72, %v72
    %v85 = vpack.c.bf16 %v73, %v73
    %v86 = vpack.c.bf16 %v74, %v74
    %v87 = vpack.c.bf16 %v75, %v75
    %v88 = vld [vmem:[#allocation5] sm:$0xf]
    %v89 = vld [vmem:[#allocation5 + $0x4] sm:$0xf]
    %v90 = vld [vmem:[#allocation5 + $0x8] sm:$0xf]
    %v91 = vld [vmem:[#allocation5 + $0xc] sm:$0xf]
    %v92 = vld [vmem:[#allocation5 + $0x10] sm:$0xf]
    %v93 = vld [vmem:[#allocation5 + $0x14] sm:$0xf]
    %v94 = vld [vmem:[#allocation5 + $0x18] sm:$0xf]
    %v95 = vld [vmem:[#allocation5 + $0x1c] sm:$0xf]
    %v96 = vld [vmem:[#allocation5 + $0x20] sm:$0xf]
    %v97 = vld [vmem:[#allocation5 + $0x24] sm:$0xf]
    %v98 = vld [vmem:[#allocation5 + $0x28] sm:$0xf]
    %v99 = vld [vmem:[#allocation5 + $0x2c] sm:$0xf]
    %v100 = vld [vmem:[#allocation5 + $0x30] sm:$0xf]
    %v101 = vld [vmem:[#allocation5 + $0x34] sm:$0xf]
    %v102 = vld [vmem:[#allocation5 + $0x38] sm:$0xf]
    %v103 = vld [vmem:[#allocation5 + $0x3c] sm:$0xf]
    %v104 = vld [vmem:[#allocation5 + $0x40] sm:$0xf]
    %v105 = vld [vmem:[#allocation5 + $0x44] sm:$0xf]
    %v106 = vld [vmem:[#allocation5 + $0x48] sm:$0xf]
    %v107 = vld [vmem:[#allocation5 + $0x4c] sm:$0xf]
    %v108 = vld [vmem:[#allocation5 + $0x50] sm:$0xf]
    %v109 = vld [vmem:[#allocation5 + $0x54] sm:$0xf]
    %v110 = vld [vmem:[#allocation5 + $0x58] sm:$0xf]
    %v111 = vld [vmem:[#allocation5 + $0x5c] sm:$0xf]
    %v112 = vld [vmem:[#allocation5 + $0x60] sm:$0xf]
    %v113 = vld [vmem:[#allocation5 + $0x64] sm:$0xf]
    %v114 = vld [vmem:[#allocation5 + $0x68] sm:$0xf]
    %v115 = vld [vmem:[#allocation5 + $0x6c] sm:$0xf]
    %v116 = vld [vmem:[#allocation5 + $0x70] sm:$0xf]
    %v117 = vld [vmem:[#allocation5 + $0x74] sm:$0xf]
    %v118 = vld [vmem:[#allocation5 + $0x78] sm:$0xf]
    %v119 = vld [vmem:[#allocation5 + $0x7c] sm:$0xf]
    %v120 = vld [vmem:[#allocation5 + $0x80] sm:$0xf]
    %v121 = vld [vmem:[#allocation5 + $0x84] sm:$0xf]
    %v122 = vld [vmem:[#allocation5 + $0x88] sm:$0xf]
    %v123 = vld [vmem:[#allocation5 + $0x8c] sm:$0xf]
    %v124 = vld [vmem:[#allocation5 + $0x90] sm:$0xf]
    %v125 = vld [vmem:[#allocation5 + $0x94] sm:$0xf]
    %v126 = vld [vmem:[#allocation5 + $0x98] sm:$0xf]
    %v127 = vld [vmem:[#allocation5 + $0x9c] sm:$0xf]
    %v128 = vld [vmem:[#allocation5 + $0xa0] sm:$0xf]
    %v129 = vld [vmem:[#allocation5 + $0xa4] sm:$0xf]
    %v130 = vld [vmem:[#allocation5 + $0xa8] sm:$0xf]
    %v131 = vld [vmem:[#allocation5 + $0xac] sm:$0xf]
    %v132 = vld [vmem:[#allocation5 + $0xb0] sm:$0xf]
    %v133 = vld [vmem:[#allocation5 + $0xb4] sm:$0xf]
    %v134 = vld [vmem:[#allocation5 + $0xb8] sm:$0xf]
    %v135 = vld [vmem:[#allocation5 + $0xbc] sm:$0xf]
    %v136 = vld [vmem:[#allocation5 + $0xc0] sm:$0xf]
    %v137 = vld [vmem:[#allocation5 + $0xc4] sm:$0xf]
    %v138 = vld [vmem:[#allocation5 + $0xc8] sm:$0xf]
    %v139 = vld [vmem:[#allocation5 + $0xcc] sm:$0xf]
    %v140 = vld [vmem:[#allocation5 + $0xd0] sm:$0xf]
    %v141 = vld [vmem:[#allocation5 + $0xd4] sm:$0xf]
    %v142 = vld [vmem:[#allocation5 + $0xd8] sm:$0xf]
    %v143 = vld [vmem:[#allocation5 + $0xdc] sm:$0xf]
    %v144 = vld [vmem:[#allocation5 + $0xe0] sm:$0xf]
    %v145 = vld [vmem:[#allocation5 + $0xe4] sm:$0xf]
    %v146 = vld [vmem:[#allocation5 + $0xe8] sm:$0xf]
    %v147 = vld [vmem:[#allocation5 + $0xec] sm:$0xf]
    %v148 = vld [vmem:[#allocation5 + $0xf0] sm:$0xf]
    %v149 = vld [vmem:[#allocation5 + $0xf4] sm:$0xf]
    %v150 = vld [vmem:[#allocation5 + $0xf8] sm:$0xf]
    %v151 = vld [vmem:[#allocation5 + $0xfc] sm:$0xf]
    %v152 = vld [vmem:[#allocation5 + $0x100] sm:$0xf]
    %v153 = vld [vmem:[#allocation5 + $0x104] sm:$0xf]
    %v154 = vld [vmem:[#allocation5 + $0x108] sm:$0xf]
    %v155 = vld [vmem:[#allocation5 + $0x10c] sm:$0xf]
    %v156 = vld [vmem:[#allocation5 + $0x110] sm:$0xf]
    %v157 = vld [vmem:[#allocation5 + $0x114] sm:$0xf]
    %v158 = vld [vmem:[#allocation5 + $0x118] sm:$0xf]
    %v159 = vld [vmem:[#allocation5 + $0x11c] sm:$0xf]
    %v160 = vld [vmem:[#allocation5 + $0x120] sm:$0xf]
    %v161 = vld [vmem:[#allocation5 + $0x124] sm:$0xf]
    %v162 = vld [vmem:[#allocation5 + $0x128] sm:$0xf]
    %v163 = vld [vmem:[#allocation5 + $0x12c] sm:$0xf]
    %v164 = vld [vmem:[#allocation5 + $0x130] sm:$0xf]
    %v165 = vld [vmem:[#allocation5 + $0x134] sm:$0xf]
    %v166 = vld [vmem:[#allocation5 + $0x138] sm:$0xf]
    %v167 = vld [vmem:[#allocation5 + $0x13c] sm:$0xf]
    %v168 = vld [vmem:[#allocation5 + $0x140] sm:$0xf]
    %v169 = vld [vmem:[#allocation5 + $0x144] sm:$0xf]
    %v170 = vld [vmem:[#allocation5 + $0x148] sm:$0xf]
    %v171 = vld [vmem:[#allocation5 + $0x14c] sm:$0xf]
    %v172 = vld [vmem:[#allocation5 + $0x150] sm:$0xf]
    %v173 = vld [vmem:[#allocation5 + $0x154] sm:$0xf]
    %v174 = vld [vmem:[#allocation5 + $0x158] sm:$0xf]
    %v175 = vld [vmem:[#allocation5 + $0x15c] sm:$0xf]
    %v176 = vld [vmem:[#allocation5 + $0x160] sm:$0xf]
    %v177 = vld [vmem:[#allocation5 + $0x164] sm:$0xf]
    %v178 = vld [vmem:[#allocation5 + $0x168] sm:$0xf]
    %v179 = vld [vmem:[#allocation5 + $0x16c] sm:$0xf]
    %v180 = vld [vmem:[#allocation5 + $0x170] sm:$0xf]
    %v181 = vld [vmem:[#allocation5 + $0x174] sm:$0xf]
    %v182 = vld [vmem:[#allocation5 + $0x178] sm:$0xf]
    %v183 = vld [vmem:[#allocation5 + $0x17c] sm:$0xf]
    %v184 = vld [vmem:[%s2] sm:$0x1]
    %v186 = vperm.slane %v184, 0
    %v284 = vunpack.c.l.b16 %v88
    %v285 = vunpack.c.l.b16 %v89
    %v286 = vunpack.c.l.b16 %v90
    %v287 = vunpack.c.l.b16 %v91
    %v288 = vunpack.c.l.b16 %v92
    %v289 = vunpack.c.l.b16 %v93
    %v290 = vunpack.c.l.b16 %v94
    %v291 = vunpack.c.l.b16 %v95
    %v292 = vunpack.c.l.b16 %v96
    %v293 = vunpack.c.l.b16 %v97
    %v294 = vunpack.c.l.b16 %v98
    %v295 = vunpack.c.l.b16 %v99
    %v296 = vunpack.c.l.b16 %v100
    %v297 = vunpack.c.l.b16 %v101
    %v298 = vunpack.c.l.b16 %v102
    %v299 = vunpack.c.l.b16 %v103
    %v300 = vunpack.c.l.b16 %v104
    %v301 = vunpack.c.l.b16 %v105
    %v302 = vunpack.c.l.b16 %v106
    %v303 = vunpack.c.l.b16 %v107
    %v304 = vunpack.c.l.b16 %v108
    %v305 = vunpack.c.l.b16 %v109
    %v306 = vunpack.c.l.b16 %v110
    %v307 = vunpack.c.l.b16 %v111
    %v308 = vunpack.c.l.b16 %v112
    %v309 = vunpack.c.l.b16 %v113
    %v310 = vunpack.c.l.b16 %v114
    %v311 = vunpack.c.l.b16 %v115
    %v312 = vunpack.c.l.b16 %v116
    %v313 = vunpack.c.l.b16 %v117
    %v314 = vunpack.c.l.b16 %v118
    %v315 = vunpack.c.l.b16 %v119
    %v316 = vunpack.c.l.b16 %v120
    %v317 = vunpack.c.l.b16 %v121
    %v318 = vunpack.c.l.b16 %v122
    %v319 = vunpack.c.l.b16 %v123
    %v320 = vunpack.c.l.b16 %v124
    %v321 = vunpack.c.l.b16 %v125
    %v322 = vunpack.c.l.b16 %v126
    %v323 = vunpack.c.l.b16 %v127
    %v324 = vunpack.c.l.b16 %v128
    %v325 = vunpack.c.l.b16 %v129
    %v326 = vunpack.c.l.b16 %v130
    %v327 = vunpack.c.l.b16 %v131
    %v328 = vunpack.c.l.b16 %v132
    %v329 = vunpack.c.l.b16 %v133
    %v330 = vunpack.c.l.b16 %v134
    %v331 = vunpack.c.l.b16 %v135
    %v332 = vunpack.c.l.b16 %v136
    %v333 = vunpack.c.l.b16 %v137
    %v334 = vunpack.c.l.b16 %v138
    %v335 = vunpack.c.l.b16 %v139
    %v336 = vunpack.c.l.b16 %v140
    %v337 = vunpack.c.l.b16 %v141
    %v338 = vunpack.c.l.b16 %v142
    %v339 = vunpack.c.l.b16 %v143
    %v340 = vunpack.c.l.b16 %v144
    %v341 = vunpack.c.l.b16 %v145
    %v342 = vunpack.c.l.b16 %v146
    %v343 = vunpack.c.l.b16 %v147
    %v344 = vunpack.c.l.b16 %v148
    %v345 = vunpack.c.l.b16 %v149
    %v346 = vunpack.c.l.b16 %v150
    %v347 = vunpack.c.l.b16 %v151
    %v348 = vunpack.c.l.b16 %v152
    %v349 = vunpack.c.l.b16 %v153
    %v350 = vunpack.c.l.b16 %v154
    %v351 = vunpack.c.l.b16 %v155
    %v352 = vunpack.c.l.b16 %v156
    %v353 = vunpack.c.l.b16 %v157
    %v354 = vunpack.c.l.b16 %v158
    %v355 = vunpack.c.l.b16 %v159
    %v356 = vunpack.c.l.b16 %v160
    %v357 = vunpack.c.l.b16 %v161
    %v358 = vunpack.c.l.b16 %v162
    %v359 = vunpack.c.l.b16 %v163
    %v360 = vunpack.c.l.b16 %v164
    %v361 = vunpack.c.l.b16 %v165
    %v362 = vunpack.c.l.b16 %v166
    %v363 = vunpack.c.l.b16 %v167
    %v364 = vunpack.c.l.b16 %v168
    %v365 = vunpack.c.l.b16 %v169
    %v366 = vunpack.c.l.b16 %v170
    %v367 = vunpack.c.l.b16 %v171
    %v368 = vunpack.c.l.b16 %v172
    %v369 = vunpack.c.l.b16 %v173
    %v370 = vunpack.c.l.b16 %v174
    %v371 = vunpack.c.l.b16 %v175
    %v372 = vunpack.c.l.b16 %v176
    %v373 = vunpack.c.l.b16 %v177
    %v374 = vunpack.c.l.b16 %v178
    %v375 = vunpack.c.l.b16 %v179
    %v376 = vunpack.c.l.b16 %v180
    %v377 = vunpack.c.l.b16 %v181
    %v378 = vunpack.c.l.b16 %v182
    %v379 = vunpack.c.l.b16 %v183
    %v380 = vpack.c.b16 %v285, %v284
    %v381 = vpack.c.b16 %v287, %v286
    %v382 = vpack.c.b16 %v289, %v288
    %v383 = vpack.c.b16 %v291, %v290
    %v384 = vpack.c.b16 %v293, %v292
    %v385 = vpack.c.b16 %v295, %v294
    %v386 = vpack.c.b16 %v297, %v296
    %v387 = vpack.c.b16 %v299, %v298
    %v388 = vpack.c.b16 %v301, %v300
    %v389 = vpack.c.b16 %v303, %v302
    %v390 = vpack.c.b16 %v305, %v304
    %v391 = vpack.c.b16 %v307, %v306
    %v392 = vpack.c.b16 %v309, %v308
    %v393 = vpack.c.b16 %v311, %v310
    %v394 = vpack.c.b16 %v313, %v312
    %v395 = vpack.c.b16 %v315, %v314
    %v396 = vpack.c.b16 %v317, %v316
    %v397 = vpack.c.b16 %v319, %v318
    %v398 = vpack.c.b16 %v321, %v320
    %v399 = vpack.c.b16 %v323, %v322
    %v400 = vpack.c.b16 %v325, %v324
    %v401 = vpack.c.b16 %v327, %v326
    %v402 = vpack.c.b16 %v329, %v328
    %v403 = vpack.c.b16 %v331, %v330
    %v404 = vpack.c.b16 %v333, %v332
    %v405 = vpack.c.b16 %v335, %v334
    %v406 = vpack.c.b16 %v337, %v336
    %v407 = vpack.c.b16 %v339, %v338
    %v408 = vpack.c.b16 %v341, %v340
    %v409 = vpack.c.b16 %v343, %v342
    %v410 = vpack.c.b16 %v345, %v344
    %v411 = vpack.c.b16 %v347, %v346
    %v412 = vpack.c.b16 %v349, %v348
    %v413 = vpack.c.b16 %v351, %v350
    %v414 = vpack.c.b16 %v353, %v352
    %v415 = vpack.c.b16 %v355, %v354
    %v416 = vpack.c.b16 %v357, %v356
    %v417 = vpack.c.b16 %v359, %v358
    %v418 = vpack.c.b16 %v361, %v360
    %v419 = vpack.c.b16 %v363, %v362
    %v420 = vpack.c.b16 %v365, %v364
    %v421 = vpack.c.b16 %v367, %v366
    %v422 = vpack.c.b16 %v369, %v368
    %v423 = vpack.c.b16 %v371, %v370
    %v424 = vpack.c.b16 %v373, %v372
    %v425 = vpack.c.b16 %v375, %v374
    %v426 = vpack.c.b16 %v377, %v376
    %v427 = vpack.c.b16 %v379, %v378
    %476 = vmatpush.bf16.msra.mxu0 %v387
    %477 = vmatpush.bf16.msra.mxu0 %v386
    %478 = vmatpush.bf16.msra.mxu0 %v385
    %479 = vmatpush.bf16.msra.mxu0 %v384
    %480 = vmatpush.bf16.msra.mxu0 %v383
    %481 = vmatpush.bf16.msra.mxu0 %v382
    %482 = vmatpush.bf16.msra.mxu0 %v381
    %483 = vmatpush.bf16.msra.mxu0 %v380
    %484 = vmatmul.bf16.gmra.mxu0 %v82
    %v485 = vpop.f32.mrf.mxu0
    %v486 = vadd.f32 %v186, %v485
    %v487 = vpop.f32.mrf.mxu0
    %488 = vdwg.mxu0
    %489 = vmatpush.bf16.msra.mxu0 %v395
    %490 = vmatpush.bf16.msra.mxu0 %v394
    %491 = vmatpush.bf16.msra.mxu0 %v393
    %492 = vmatpush.bf16.msra.mxu0 %v392
    %493 = vmatpush.bf16.msra.mxu0 %v391
    %494 = vmatpush.bf16.msra.mxu0 %v390
    %495 = vmatpush.bf16.msra.mxu0 %v389
    %496 = vmatpush.bf16.msra.mxu0 %v388
    %497 = vmatmul.bf16.gmra.mxu0 %v83
    %v498 = vpop.f32.mrf.mxu0
    %v499 = vadd.f32 %v486, %v498
    %v500 = vpop.f32.mrf.mxu0
    %501 = vdwg.mxu0
    %502 = vmatpush.bf16.msra.mxu0 %v403
    %503 = vmatpush.bf16.msra.mxu0 %v402
    %504 = vmatpush.bf16.msra.mxu0 %v401
    %505 = vmatpush.bf16.msra.mxu0 %v400
    %506 = vmatpush.bf16.msra.mxu0 %v399
    %507 = vmatpush.bf16.msra.mxu0 %v398
    %508 = vmatpush.bf16.msra.mxu0 %v397
    %509 = vmatpush.bf16.msra.mxu0 %v396
    %510 = vmatmul.bf16.gmra.mxu0 %v84
    %v511 = vpop.f32.mrf.mxu0
    %v512 = vadd.f32 %v499, %v511
    %v513 = vpop.f32.mrf.mxu0
    %514 = vdwg.mxu0
    %515 = vmatpush.bf16.msra.mxu0 %v411
    %516 = vmatpush.bf16.msra.mxu0 %v410
    %517 = vmatpush.bf16.msra.mxu0 %v409
    %518 = vmatpush.bf16.msra.mxu0 %v408
    %519 = vmatpush.bf16.msra.mxu0 %v407
    %520 = vmatpush.bf16.msra.mxu0 %v406
    %521 = vmatpush.bf16.msra.mxu0 %v405
    %522 = vmatpush.bf16.msra.mxu0 %v404
    %523 = vmatmul.bf16.gmra.mxu0 %v85
    %v524 = vpop.f32.mrf.mxu0
    %v525 = vadd.f32 %v512, %v524
    %v526 = vpop.f32.mrf.mxu0
    %527 = vdwg.mxu0
    %528 = vmatpush.bf16.msra.mxu0 %v419
    %529 = vmatpush.bf16.msra.mxu0 %v418
    %530 = vmatpush.bf16.msra.mxu0 %v417
    %531 = vmatpush.bf16.msra.mxu0 %v416
    %532 = vmatpush.bf16.msra.mxu0 %v415
    %533 = vmatpush.bf16.msra.mxu0 %v414
    %534 = vmatpush.bf16.msra.mxu0 %v413
    %535 = vmatpush.bf16.msra.mxu0 %v412
    %536 = vmatmul.bf16.gmra.mxu0 %v86
    %v537 = vpop.f32.mrf.mxu0
    %v538 = vadd.f32 %v525, %v537
    %v539 = vpop.f32.mrf.mxu0
    %540 = vdwg.mxu0
    %541 = vmatpush.bf16.msra.mxu0 %v427
    %542 = vmatpush.bf16.msra.mxu0 %v426
    %543 = vmatpush.bf16.msra.mxu0 %v425
    %544 = vmatpush.bf16.msra.mxu0 %v424
    %545 = vmatpush.bf16.msra.mxu0 %v423
    %546 = vmatpush.bf16.msra.mxu0 %v422
    %547 = vmatpush.bf16.msra.mxu0 %v421
    %548 = vmatpush.bf16.msra.mxu0 %v420
    %549 = vmatmul.bf16.gmra.mxu0 %v87
    %v550 = vpop.f32.mrf.mxu0
    %v551 = vadd.f32 %v538, %v550
    %v552 = vpop.f32.mrf.mxu0
    %553 = vdwg.mxu0
    %v554 = vmul.f32 %v551, %v551
    %vm555 = vcmask 1041408
    %v556 = vsel %vm555, %v554, 0.0
    %557 = vadd.xlane.f32.xlu0 %v556
    %v558 = vpop.xlane.xlu0 %557
    %v559 = vadd.f32 %v558, 1e-12
    %v560 = vrsqrt.pop %v559
    %v561 = vmul.f32 %v560, %v559
    %v562 = vmul.f32 %v561, %v560
    %v563 = vmul.f32 0.5, %v562
    %v564 = vsub.f32 1.5, %v563
    %v565 = vmul.f32 %v560, %v564
    %vm566 = vweird.f32 %v559
    %vm567 = vweird.f32 %v560
    %vm568 = vmor %vm566, %vm567
    %v569 = vsel %vm568, %v560, %v565
    %v570 = vmul.f32 %v551, %v569
    %v571 = vpack.c.bf16 %v570, %v570
    %v572 = vld [vmem:[#allocation7] sm:$0xf]
    %v573 = vld [vmem:[#allocation7 + $0x4] sm:$0xf]
    %v574 = vld [vmem:[#allocation7 + $0x8] sm:$0xf]
    %v575 = vld [vmem:[#allocation7 + $0xc] sm:$0xf]
    %v576 = vld [vmem:[#allocation7 + $0x10] sm:$0xf]
    %v577 = vld [vmem:[#allocation7 + $0x14] sm:$0xf]
    %v578 = vld [vmem:[#allocation7 + $0x18] sm:$0xf]
    %v579 = vld [vmem:[#allocation7 + $0x1c] sm:$0xf]
    %v580 = vld [vmem:[#allocation7 + $0x20] sm:$0xf]
    %v581 = vld [vmem:[#allocation7 + $0x24] sm:$0xf]
    %v582 = vld [vmem:[#allocation7 + $0x28] sm:$0xf]
    %v583 = vld [vmem:[#allocation7 + $0x2c] sm:$0xf]
    %v584 = vld [vmem:[#allocation7 + $0x30] sm:$0xf]
    %v585 = vld [vmem:[#allocation7 + $0x34] sm:$0xf]
    %v586 = vld [vmem:[#allocation7 + $0x38] sm:$0xf]
    %v587 = vld [vmem:[#allocation7 + $0x3c] sm:$0xf]
    %v604 = vunpack.c.l.b16 %v572
    %v605 = vunpack.c.l.b16 %v573
    %v606 = vunpack.c.l.b16 %v574
    %v607 = vunpack.c.l.b16 %v575
    %v608 = vunpack.c.l.b16 %v576
    %v609 = vunpack.c.l.b16 %v577
    %v610 = vunpack.c.l.b16 %v578
    %v611 = vunpack.c.l.b16 %v579
    %v612 = vunpack.c.l.b16 %v580
    %v613 = vunpack.c.l.b16 %v581
    %v614 = vunpack.c.l.b16 %v582
    %v615 = vunpack.c.l.b16 %v583
    %v616 = vunpack.c.l.b16 %v584
    %v617 = vunpack.c.l.b16 %v585
    %v618 = vunpack.c.l.b16 %v586
    %v619 = vunpack.c.l.b16 %v587
    %v620 = vpack.c.b16 %v605, %v604
    %v621 = vpack.c.b16 %v607, %v606
    %v622 = vpack.c.b16 %v609, %v608
    %v623 = vpack.c.b16 %v611, %v610
    %v624 = vpack.c.b16 %v613, %v612
    %v625 = vpack.c.b16 %v615, %v614
    %v626 = vpack.c.b16 %v617, %v616
    %v627 = vpack.c.b16 %v619, %v618
    %636 = vmatpush.bf16.msra.mxu0 %v627
    %637 = vmatpush.bf16.msra.mxu0 %v626
    %638 = vmatpush.bf16.msra.mxu0 %v625
    %639 = vmatpush.bf16.msra.mxu0 %v624
    %640 = vmatpush.bf16.msra.mxu0 %v623
    %641 = vmatpush.bf16.msra.mxu0 %v622
    %642 = vmatpush.bf16.msra.mxu0 %v621
    %643 = vmatpush.bf16.msra.mxu0 %v620
    %644 = vmatmul.bf16.gmra.mxu0 %v571
    %v645 = vpop.f32.mrf.mxu0
    %v646 = vadd.f32 0.0, %v645
    %v647 = vpop.f32.mrf.mxu0
    %648 = vdwg.mxu0
    %649 = vst [vmem:[#allocation8] sm:$0x3] %v646
    // Predicated region
    $region30: #{tpu_custom_call.1} parent=1 // pred_check
      _
    $region31: #{tpu_custom_call.1} parent=1 // pred_check_branch
      %651 = sbr.rel (0) target = $region33
    $region32: #{tpu_custom_call.1} parent=1 // pred_region
      %653 = vsyncadd [#allocation4], 0
      %s655 = sshll.u32 [#allocation8], 4
      %s656 = int_to_ptr.vmem [resolvable:$true] %s655
      %s657 = sshll.u32 %s4, 4
      %s658 = int_to_ptr.hbm [resolvable:$true] %s657
      %660 = dma.vmem_to_hbm [thread:$0]  %s656, 32, %s658, [#allocation4]
    $region33: #{tpu_custom_call.1} parent=1 // pred_fallthru
      _
    // Predicated region
    $region34: #{tpu_custom_call.1} parent=1 // pred_check
      _
    $region35: #{tpu_custom_call.1} parent=1 // pred_check_branch
      %662 = sbr.rel (0) target = $region37
    $region36: #{tpu_custom_call.1} parent=1 // pred_region
      %664 = dma.done [#allocation4], 32
    $region37: #{tpu_custom_call.1} parent=1 // pred_fallthru
      _
    %665 = vsyncpa [#allocation3], 1
    %666 = vsyncpa [#allocation6], 1
    %667 = vsyncpa [#allocation4], 1

</llo_original>
